<compile_context>
chip_gen: v7x
topology: tpu7x:2x2x1
jax: 0.10.0
libtpu: 0.0.40
codegen_flags: <defaults>
</compile_context>

<pallas_src>
import numpy as np
import jax
import jax.numpy as jnp
from jax.experimental import pallas as pl
from jax.experimental.pallas import tpu as pltpu

_LANE = 128


def _sublane(dtype) -> int:
    """Sublane packing multiple: 8 for 4-byte, 16 for 2-byte, 32 for 1-byte."""
    return max(8, 32 // jnp.dtype(dtype).itemsize)


def _copy_kernel(x_ref, o_ref):
    # Whole current tile: load and store back unchanged (in-place, aliased).
    o_ref[...] = x_ref[...]


def _tiled_identity_copy(x2d: jax.Array) -> jax.Array:
    """Pipelined, lane-dense, in-place (aliased) copy of a (rows, cols) slab."""
    rows, cols = x2d.shape
    itemsize = jnp.dtype(x2d.dtype).itemsize
    sub = _sublane(x2d.dtype)

    # ~2 MiB per block: (in + out) x double-buffering => ~8 MiB of VMEM,
    # comfortably under the scoped defaults on v5e (16 MiB), v6e (32 MiB) and
    # v7x (32 MiB of its 64 MiB physical VMEM).
    target_rows = max(sub, (2 * 1024 * 1024) // (cols * itemsize))
    tr = min(rows, (target_rows // sub) * sub)
    grid = (pl.cdiv(rows, tr),)

    return pl.pallas_call(
        _copy_kernel,
        out_shape=jax.ShapeDtypeStruct((rows, cols), x2d.dtype),
        grid=grid,
        in_specs=[pl.BlockSpec((tr, cols), lambda i: (i, 0))],
        out_specs=pl.BlockSpec((tr, cols), lambda i: (i, 0)),
        # Output buffer is the (donated) input buffer: no extra HBM allocation.
        input_output_aliases={0: 0},
        compiler_params=pltpu.CompilerParams(
            # Independent row tiles -> shard across v7x's 2 TensorCores.
            dimension_semantics=("parallel",),
        ),
        cost_estimate=pl.CostEstimate(
            flops=0,
            transcendentals=0,
            bytes_accessed=2 * rows * cols * itemsize,
        ),
    )(x2d)


def _shortcut_impl(x: jax.Array) -> jax.Array:
    """Identity forward pass (NCHW in, NCHW out) via a tiled Pallas copy."""
    orig_shape = x.shape
    total = x.size
    if total == 0:
        return x

    sub = _sublane(x.dtype)
    unit = sub * _LANE

    # Pad the flat element count up to a multiple of (sublanes * 128) so every
    # block is a full, unmasked vreg tile; slice the padding back off below.
    flat = x.reshape(-1)
    padded = pl.cdiv(total, unit) * unit
    if padded != total:
        flat = jnp.pad(flat, (0, padded - total))

    # Widest lane-dense layout that evenly divides the (padded) element count:
    # wide blocks => wide unmasked vector stores and fewer, fatter DMAs.
    cols = _LANE
    for cand in (4096, 2048, 1024, 512, 256):
        if padded % (cand * sub) == 0:
            cols = cand
            break
    rows = padded // cols

    out2d = _tiled_identity_copy(flat.reshape(rows, cols))

    out_flat = out2d.reshape(-1)
    if padded != total:
        out_flat = out_flat[:total]
    return out_flat.reshape(orig_shape)


# Donate the input so the aliased Pallas output can reuse its HBM buffer
# (the caller's `x` is consumed, matching in-place identity semantics).
shortcut_forward = jax.jit(_shortcut_impl, donate_argnums=(0,))


if __name__ == "__main__":
    key = jax.random.PRNGKey(0)
    # Small NCHW input consistent with a YOLO feature map: (batch=2, C=4, H=16, W=16)
    x = jax.random.normal(key, (2, 4, 16, 16), dtype=jnp.float32)

    # Host-side reference copy: `x` itself is donated to the kernel call.
    x_host = np.asarray(x)

    y = shortcut_forward(x)
    jax.block_until_ready(y)

    # Verify identity semantics exactly (shape, dtype, values).
    assert y.shape == tuple(x_host.shape)
    assert y.dtype == x_host.dtype
    assert np.array_equal(np.asarray(y), x_host)

    print("KERNEL_OK")
</pallas_src>

<mosaic_0001>
module attributes {stable_mosaic.version = 11 : i64} {
  func.func @_copy_kernel(%arg0: i32, %arg1: memref<8x256xf32, #tpu.memory_space<vmem>>, %arg2: memref<8x256xf32, #tpu.memory_space<vmem>>) attributes {dimension_semantics = [#tpu.dimension_semantics<parallel>], iteration_bounds = array<i64: 1>, scalar_prefetch = 0 : i64, scratch_operands = 0 : i64, tpu.core_type = #tpu.core_type<tc>, window_params = [{transform_indices = @transform_0, window_bounds = array<i64: 8, 256>}, {transform_indices = @transform_1, window_bounds = array<i64: 8, 256>}]} {
    %c0 = arith.constant 0 : index
    %c0_0 = arith.constant 0 : index
    %0 = vector.load %arg1[%c0, %c0_0] : memref<8x256xf32, #tpu.memory_space<vmem>>, vector<8x256xf32>
    %c0_1 = arith.constant 0 : index
    %c0_2 = arith.constant 0 : index
    %1 = vector.load %arg2[%c0_1, %c0_2] : memref<8x256xf32, #tpu.memory_space<vmem>>, vector<8x256xf32>
    tpu.vector_store %arg2[%c0_1, %c0_2], %0 {strides = array<i32>} : memref<8x256xf32, #tpu.memory_space<vmem>>, vector<8x256xf32>,
    return
  }
  func.func @transform_0(%arg0: i32) -> (i32, i32) {
    %c0_i32 = arith.constant 0 : i32
    %c0_i32_0 = arith.constant 0 : i32
    return %arg0, %c0_i32 : i32, i32
  }
  func.func @transform_1(%arg0: i32) -> (i32, i32) {
    %c0_i32 = arith.constant 0 : i32
    %c0_i32_0 = arith.constant 0 : i32
    return %arg0, %c0_i32 : i32, i32
  }
}

</mosaic_0001>

<llo_original>
// kernel: _shortcut_impl.1
$region0: #{_shortcut_impl.1}
  #allocation0 [shape = 'u32[]', space=smem, size = 0x4, offset = 0x4, fixed_abs, tag = 'smem constant byte address 0x4 - core index']
  #allocation1 [shape = 'u32[144,128]{1,0:T(1,128)}', space=vmem, size = 0x12000, scoped, tag = 'internal scratch']
  %s0 = inlined_call_operand.vmem [shape: f32[8,256], index: 0, kind: input, shape index: {}, may-alias: {0,1}]
  %s1 = inlined_call_operand.vmem [shape: f32[8,256], index: 1, kind: output, shape index: {}, may-alias: {0,1}]
  %s2 = sld [smem:[#allocation0]]
  $region14: #{_shortcut_impl.1} parent=0
    _
  %s4 = ssub.s32 1, %s2
  %s5 = scalar_select 0, %s4, %s2
  // Predicated region
  $region2: #{_shortcut_impl.1} parent=0 // pred_check
    _
  $region3: #{_shortcut_impl.1} parent=0 // pred_check_branch
    %7 = sbr.rel (0) target = $region5
  $region4: #{_shortcut_impl.1} parent=0 // pred_region
    _
  $region5: #{_shortcut_impl.1} parent=0 // pred_fallthru
    _
  %v8 = vld [vmem:[%s0] sm:$0xff]
  %v9 = vld [vmem:[%s0 + $0x8] sm:$0xff]
  %10 = vst [vmem:[%s1] sm:$0xff] %v8
  %11 = vst [vmem:[%s1 + $0x8] sm:$0xff] %v9
  // Predicated region
  $region6: #{_shortcut_impl.1} parent=0 // pred_check
    _
  $region7: #{_shortcut_impl.1} parent=0 // pred_check_branch
    %13 = sbr.rel (0) target = $region9
  $region8: #{_shortcut_impl.1} parent=0 // pred_region
    _
  $region9: #{_shortcut_impl.1} parent=0 // pred_fallthru
    _
  // Predicated region
  $region10: #{_shortcut_impl.1} parent=0 // pred_check
    _
  $region11: #{_shortcut_impl.1} parent=0 // pred_check_branch
    %15 = sbr.rel (0) target = $region13
  $region12: #{_shortcut_impl.1} parent=0 // pred_region
    _
  $region13: #{_shortcut_impl.1} parent=0 // pred_fallthru
    _

</llo_original>
